<compile_context>
chip_gen: v7x
topology: tpu7x:2x2x1
jax: 0.10.0
libtpu: 0.0.40
codegen_flags: <defaults>
</compile_context>

<pallas_src>
import jax
import jax.numpy as jnp
from jax.experimental import pallas as pl
from jax.experimental.pallas import tpu as pltpu


def _swish_kernel(x_ref, o_ref):
    x = x_ref[...]
    if x.dtype == jnp.bfloat16:
        # Native bf16 compute on v6e/v7x (exp/tanh go to the EUP slot anyway).
        y = x * jax.nn.sigmoid(x)
    else:
        xf = x.astype(jnp.float32)
        y = xf * jax.nn.sigmoid(xf)
    o_ref[...] = y.astype(o_ref.dtype)


def _swish_call(x2d, block_rows, block_cols, grid_rows):
    rows, cols = x2d.shape
    return pl.pallas_call(
        _swish_kernel,
        out_shape=jax.ShapeDtypeStruct((rows, cols), x2d.dtype),
        grid_spec=pltpu.PrefetchScalarGridSpec(
            num_scalar_prefetch=0,
            grid=(grid_rows,),
            in_specs=[pl.BlockSpec((block_rows, block_cols), lambda i: (i, 0))],
            out_specs=pl.BlockSpec((block_rows, block_cols), lambda i: (i, 0)),
        ),
        compiler_params=pltpu.CompilerParams(
            dimension_semantics=("parallel",),
            # 16 MiB of double-buffered blocks + headroom; lifts v5e's 16 MiB
            # default scoped limit, no-op on v6e/v7x (their default).
            vmem_limit_bytes=32 * 1024 * 1024,
        ),
    )(x2d)


def swish_ref(x):
    xf = x.astype(jnp.float32)
    return (xf * jax.nn.sigmoid(xf)).astype(x.dtype)


def swish_pallas(x, *, tile_rows=1024, lane_w=1024):
    """Elementwise swish via Pallas for any input shape.

    The flat tensor is viewed as (rows, lane_w) with lane_w a large multiple
    of 128 for lane-dense DMA.  Blocks are (tile_rows, lane_w) (partial last
    block allowed since tile_rows % 8 == 0).  A leftover tail of < lane_w
    elements is computed with plain jnp instead of padding the whole tensor.
    """
    orig_shape = x.shape
    flat = x.reshape(-1)
    n = flat.shape[0]
    if n == 0:
        return x

    n_main = (n // lane_w) * lane_w

    if n_main == 0:
        # Whole tensor smaller than one lane-row: one full-array block
        # (block == full array dims, so no (8,128) divisibility needed).
        out2d = _swish_call(flat.reshape(1, n), 1, n, 1)
        return out2d.reshape(orig_shape)

    rows = n_main // lane_w
    x2d = flat[:n_main].reshape(rows, lane_w)

    if rows <= tile_rows:
        block_rows = rows            # full-extent block: any row count is legal
    else:
        block_rows = tile_rows       # multiple of 8; last grid block may be partial

    grid_rows = pl.cdiv(rows, block_rows)
    main_out = _swish_call(x2d, block_rows, lane_w, grid_rows).reshape(-1)

    if n_main == n:
        return main_out.reshape(orig_shape)

    # < lane_w leftover elements: compute in plain jnp (avoids a full-tensor
    # pad copy + slice copy for non-aligned sizes).
    tail_out = swish_ref(flat[n_main:])
    return jnp.concatenate([main_out, tail_out]).reshape(orig_shape)


if __name__ == "__main__":
    key = jax.random.PRNGKey(0)

    # Primary test: typical feature tensor (B, C, H, W), f32, lane-aligned path.
    x = jax.random.normal(key, (2, 4, 16, 16), dtype=jnp.float32)
    y = swish_pallas(x)
    jax.block_until_ready(y)
    y_ref = swish_ref(x)
    assert y.shape == x.shape and y.dtype == x.dtype
    assert jnp.allclose(y, y_ref, atol=1e-6, rtol=1e-6)

    # Non-aligned shape: exercises kernel-main + jnp-tail path.
    k1, k2 = jax.random.split(key)
    x2 = jax.random.normal(k1, (4, 300), dtype=jnp.float32)  # 1200 elems
    y2 = swish_pallas(x2)
    jax.block_until_ready(y2)
    assert jnp.allclose(y2, swish_ref(x2), atol=1e-6, rtol=1e-6)

    # Tiny input: exercises single full-array-block path.
    x3 = jax.random.normal(k2, (3, 5, 7), dtype=jnp.float32)  # 105 elems
    y3 = swish_pallas(x3)
    jax.block_until_ready(y3)
    assert jnp.allclose(y3, swish_ref(x3), atol=1e-6, rtol=1e-6)

    print("KERNEL_OK")
</pallas_src>

<mosaic_0001>
module attributes {stable_mosaic.version = 11 : i64} {
  func.func @_swish_kernel(%arg0: i32, %arg1: memref<2x1024xf32, #tpu.memory_space<vmem>>, %arg2: memref<2x1024xf32, #tpu.memory_space<vmem>>) attributes {dimension_semantics = [#tpu.dimension_semantics<parallel>], iteration_bounds = array<i64: 1>, scalar_prefetch = 0 : i64, scratch_operands = 0 : i64, tpu.core_type = #tpu.core_type<tc>, window_params = [{transform_indices = @transform_0, window_bounds = array<i64: 2, 1024>}, {transform_indices = @transform_1, window_bounds = array<i64: 2, 1024>}]} {
    %c0 = arith.constant 0 : index
    %c0_0 = arith.constant 0 : index
    %0 = vector.load %arg1[%c0, %c0_0] : memref<2x1024xf32, #tpu.memory_space<vmem>>, vector<2x1024xf32>
    %1 = arith.negf %0 : vector<2x1024xf32>
    %2 = math.exp %1 : vector<2x1024xf32>
    %cst = arith.constant 1.000000e+00 : f32
    %3 = vector.broadcast %cst : f32 to vector<2x1024xf32>
    %4 = arith.addf %3, %2 : vector<2x1024xf32>
    %5 = arith.divf %3, %4 : vector<2x1024xf32>
    %6 = arith.mulf %0, %5 : vector<2x1024xf32>
    %c0_1 = arith.constant 0 : index
    %c0_2 = arith.constant 0 : index
    %7 = vector.load %arg2[%c0_1, %c0_2] : memref<2x1024xf32, #tpu.memory_space<vmem>>, vector<2x1024xf32>
    tpu.vector_store %arg2[%c0_1, %c0_2], %6 {strides = array<i32>} : memref<2x1024xf32, #tpu.memory_space<vmem>>, vector<2x1024xf32>,
    return
  }
  func.func @transform_0(%arg0: i32) -> (i32, i32) {
    %c0_i32 = arith.constant 0 : i32
    %c0_i32_0 = arith.constant 0 : i32
    return %arg0, %c0_i32 : i32, i32
  }
  func.func @transform_1(%arg0: i32) -> (i32, i32) {
    %c0_i32 = arith.constant 0 : i32
    %c0_i32_0 = arith.constant 0 : i32
    return %arg0, %c0_i32 : i32, i32
  }
}

</mosaic_0001>

<llo_original>
// kernel: tpu_custom_call.1
$region0: #{tpu_custom_call.1}
  #allocation0 [shape = 'u32[]', space=smem, size = 0x4, offset = 0x4, fixed_abs, tag = 'smem constant byte address 0x4 - core index']
  #allocation1 [shape = 'u32[144,128]{1,0:T(1,128)}', space=vmem, size = 0x12000, scoped, tag = 'internal scratch']
  %s0 = inlined_call_operand.hbm [shape: f32[2,1024], index: 0, kind: input, shape index: {}]
  %s1 = inlined_call_operand.hbm [shape: f32[2,1024], index: 1, kind: output, shape index: {}]
  %s2 = sld [smem:[#allocation0]]
  $region18: #{tpu_custom_call.1} parent=0
    _
  %s4 = ssub.s32 1, %s2
  %s5 = scalar_select 0, %s4, %s2
  $region1: #{tpu_custom_call.1} parent=0
    #allocation2 [shape = 'u8[8192]{0}', space=vmem, size = 0x2000, scoped, tag = 'input window, operand 0, single buffered']
    #allocation3 [shape = 's32[1]{0}', space=sflag, size = 0x4, scoped, tag = 'scoped memory for tpu_custom_call.1']
    #allocation4 [shape = 's32[1]{0}', space=sflag, size = 0x4, scoped, tag = 'scoped memory for tpu_custom_call.1']
    #allocation5 [shape = 'u8[8192]{0}', space=vmem, size = 0x2000, scoped, tag = 'output window, operand 0, single buffered']
    %6 = vsyncpa [#allocation3], 0
    %7 = vsyncpa [#allocation4], 0
    // Predicated region
    $region2: #{tpu_custom_call.1} parent=1 // pred_check
      _
    $region3: #{tpu_custom_call.1} parent=1 // pred_check_branch
      %9 = sbr.rel (0) target = $region5
    $region4: #{tpu_custom_call.1} parent=1 // pred_region
      %s11 = ssub.s32 256, 256
      %12 = vsyncadd [#allocation3], %s11
      %s14 = sshll.u32 [#allocation2], 4
      %s15 = int_to_ptr.vmem [resolvable:$true] %s14
      %17 = dma.hbm_to_vmem [thread:$0]  %s0, 256, %s15, [#allocation3]
    $region5: #{tpu_custom_call.1} parent=1 // pred_fallthru
      _
    // Predicated region
    $region6: #{tpu_custom_call.1} parent=1 // pred_check
      _
    $region7: #{tpu_custom_call.1} parent=1 // pred_check_branch
      %19 = sbr.rel (0) target = $region9
    $region8: #{tpu_custom_call.1} parent=1 // pred_region
      %20 = dma.done [#allocation3], 256
    $region9: #{tpu_custom_call.1} parent=1 // pred_fallthru
      _
    %v21 = vld [vmem:[#allocation2] sm:$0xff]
    %v22 = vld [vmem:[#allocation2 + $0x8] sm:$0xff]
    %v23 = vxor.u32 %v21, 2147483648
    %v24 = vxor.u32 %v22, 2147483648
    %v25 = vmul.f32 %v23, 1.442695
    %v26 = vpow.pop %v25
    %v27 = vmul.f32 %v24, 1.442695
    %v28 = vpow.pop %v27
    %v29 = vadd.f32 %v26, 1.0
    %v30 = vadd.f32 %v28, 1.0
    %v31 = vrcp.pop %v29
    %v32 = vmul.f32 1.0, %v31
    %v33 = vrcp.pop %v30
    %v34 = vmul.f32 1.0, %v33
    %v35 = vmul.f32 %v21, %v32
    %v36 = vmul.f32 %v22, %v34
    %37 = vst [vmem:[#allocation5] sm:$0xff] %v35
    %38 = vst [vmem:[#allocation5 + $0x8] sm:$0xff] %v36
    // Predicated region
    $region10: #{tpu_custom_call.1} parent=1 // pred_check
      _
    $region11: #{tpu_custom_call.1} parent=1 // pred_check_branch
      %40 = sbr.rel (0) target = $region13
    $region12: #{tpu_custom_call.1} parent=1 // pred_region
      %s42 = ssub.s32 256, 256
      %43 = vsyncadd [#allocation4], %s42
      %s45 = sshll.u32 [#allocation5], 4
      %s46 = int_to_ptr.vmem [resolvable:$true] %s45
      %48 = dma.vmem_to_hbm [thread:$0]  %s46, 256, %s1, [#allocation4]
    $region13: #{tpu_custom_call.1} parent=1 // pred_fallthru
      _
    // Predicated region
    $region14: #{tpu_custom_call.1} parent=1 // pred_check
      _
    $region15: #{tpu_custom_call.1} parent=1 // pred_check_branch
      %50 = sbr.rel (0) target = $region17
    $region16: #{tpu_custom_call.1} parent=1 // pred_region
      %51 = dma.done [#allocation4], 256
    $region17: #{tpu_custom_call.1} parent=1 // pred_fallthru
      _
    %52 = vsyncpa [#allocation3], 1
    %53 = vsyncpa [#allocation4], 1

</llo_original>
